<compile_context>
chip_gen: v7x
topology: tpu7x:2x2x1
jax: 0.10.0
libtpu: 0.0.40
codegen_flags: <defaults>
</compile_context>

<pallas_src>
import jax
import jax.numpy as jnp
from jax.experimental import pallas as pl
from jax.experimental.pallas import tpu as pltpu


# ---------------------------------------------------------------------------
# Kernels
# ---------------------------------------------------------------------------
def _make_fused_kernel(hw: int):
    """One-pass kernel: avg/max pooling + shared MLP + sigmoid + x*scale on a batch tile."""
    inv_hw = 1.0 / float(hw)

    def kernel(x_ref, w1t_ref, b1_ref, w2t_ref, b2_ref, o_ref):
        x = x_ref[...]                                               # (Bt, C, HW) native dtype
        # f32 accumulation only for the tiny pooled statistics.
        avg_pool = jnp.sum(x, axis=2, dtype=jnp.float32) * inv_hw    # (Bt, C)
        max_pool = jnp.max(x, axis=2).astype(jnp.float32)            # (Bt, C)

        def mlp(p):                                                  # shared weights, two calls
            h = jnp.dot(p, w1t_ref[...], preferred_element_type=jnp.float32) + b1_ref[...]
            h = jnp.maximum(h, 0.0)                                  # ReLU
            return jnp.dot(h, w2t_ref[...], preferred_element_type=jnp.float32) + b2_ref[...]

        att = mlp(avg_pool) + mlp(max_pool)                          # (Bt, C) f32
        # NOTE: the big multiply is done in x's dtype (gate cast down first); for bf16/fp16
        # inputs this adds ~1 ulp of rounding vs an all-f32 multiply-then-cast.
        scale = jax.nn.sigmoid(att).astype(x.dtype)                  # (Bt, C)
        o_ref[...] = x * scale[:, :, None]                           # broadcast over HW

    return kernel


def _make_scale_kernel(hw: int, hw_chunk: int):
    """Chunked path, pass 1: streamed sum/max over HW chunks; MLP + sigmoid at the last chunk."""
    inv_hw = 1.0 / float(hw)
    ragged = (hw % hw_chunk) != 0

    def kernel(x_ref, w1t_ref, b1_ref, w2t_ref, b2_ref, scale_ref, sum_sc, max_sc):
        c = pl.program_id(1)

        @pl.when(c == 0)
        def _():
            sum_sc[...] = jnp.zeros_like(sum_sc)
            max_sc[...] = jnp.full_like(max_sc, -jnp.inf)

        x = x_ref[...]                                               # (Bt, C, HWc)
        if ragged:
            # Only the last chunk is short; for full chunks remaining >= hw_chunk so the
            # select is a trivially-true VPU op hidden under the HBM-bound stream.
            remaining = hw - c * hw_chunk
            lane = jax.lax.broadcasted_iota(jnp.int32, (1, 1, hw_chunk), 2)
            valid = lane < remaining
            x_sum = jnp.where(valid, x, jnp.zeros((), x.dtype))
            x_max = jnp.where(valid, x, jnp.full((), jnp.finfo(x.dtype).min, x.dtype))
        else:
            x_sum = x
            x_max = x
        sum_sc[...] = sum_sc[...] + jnp.sum(x_sum, axis=2, dtype=jnp.float32)
        max_sc[...] = jnp.maximum(max_sc[...], jnp.max(x_max, axis=2).astype(jnp.float32))

        @pl.when(c == pl.num_programs(1) - 1)
        def _():
            def mlp(p):
                h = jnp.dot(p, w1t_ref[...], preferred_element_type=jnp.float32) + b1_ref[...]
                h = jnp.maximum(h, 0.0)
                return jnp.dot(h, w2t_ref[...], preferred_element_type=jnp.float32) + b2_ref[...]

            att = mlp(sum_sc[...] * inv_hw) + mlp(max_sc[...])       # (Bt, C)
            scale_ref[...] = jax.nn.sigmoid(att)[:, :, None].astype(scale_ref.dtype)

    return kernel


def _apply_kernel(scale_ref, x_ref, o_ref):
    """Chunked path, pass 2: o = x * scale, chunk by chunk."""
    x = x_ref[...]                                                   # (Bt, C, HWc)
    o_ref[...] = x * scale_ref[...].astype(x.dtype)                  # scale: (Bt, C, 1)


# ---------------------------------------------------------------------------
# Tiling helpers
# ---------------------------------------------------------------------------
def _tpu_vmem_and_cores():
    """(physical VMEM bytes per TensorCore, #TensorCores sharing the grid), with a safe fallback."""
    vmem_bytes = 128 << 20
    try:
        info = pltpu.get_tpu_info()
        vmem_bytes = int(getattr(info, "vmem_capacity_bytes", vmem_bytes))
    except Exception:
        pass
    # Heuristic: 64 MiB/TC parts (v7x) have 2 TensorCores; 128 MiB parts (v5e/v6e) have 1.
    num_tc = 2 if vmem_bytes <= (64 << 20) else 1
    return vmem_bytes, num_tc


def _pick_batch_tile(batch: int, bytes_per_batch: int, target_bytes: int, num_tc: int) -> int:
    """Largest batch tile within the byte budget; on dual-TC parts prefer an even step count."""
    cap = max(1, min(batch, target_bytes // max(bytes_per_batch, 1)))
    if num_tc >= 2 and batch > 1:
        for bt in range(cap, max(0, cap - 64), -1):
            if -(-batch // bt) % 2 == 0:          # even number of grid steps -> both TCs busy
                return bt
    return cap


# ---------------------------------------------------------------------------
# Wrapper
# ---------------------------------------------------------------------------
def channel_gate(x, w1, b1, w2, b2, *, max_block_bytes=None):
    """x: (B, C, H, W) NCHW float; w1/b1/w2/b2 are PyTorch Linear params (out_features, in_features)."""
    assert jnp.issubdtype(x.dtype, jnp.floating), "ChannelGate kernel assumes floating-point x"
    B, C, H, W = x.shape
    HW = H * W
    hid = w1.shape[0]
    itemsize = x.dtype.itemsize

    x2 = x.reshape(B, C, HW)                    # no padding, no post-slice (pure view/reshape)

    # Transposed weights / row biases -> no width-1 lane-sparse tiles in the tiny MLP.
    w1t = jnp.asarray(w1, jnp.float32).T        # (C, hid)
    w2t = jnp.asarray(w2, jnp.float32).T        # (hid, C)
    b1r = jnp.asarray(b1, jnp.float32).reshape(1, hid)
    b2r = jnp.asarray(b2, jnp.float32).reshape(1, C)

    vmem_cap, num_tc = _tpu_vmem_and_cores()
    # ~100 MiB usable on 128 MiB parts (v5e/v6e); ~52 MiB on 64 MiB v7x (compiler headroom).
    vmem_cap_limit = int(max(16 << 20, min(100 << 20, vmem_cap - (12 << 20))))

    if max_block_bytes is None:
        max_block_bytes = 8 << 20               # ~8 MiB per x block: amortizes per-step cost, 4x fits VMEM

    bytes_per_batch = C * HW * itemsize
    param_bytes = 4 * (2 * C * hid + hid + C)

    use_chunked = (bytes_per_batch > max_block_bytes) and (HW >= 256)
    # TODO(synk): a huge single-image slab with HW < 256 (giant C) would need chunking over C instead.

    if not use_chunked:
        # ---------------- fused single-pass path ----------------
        Bt = _pick_batch_tile(B, bytes_per_batch, max_block_bytes, num_tc)
        grid = (pl.cdiv(B, Bt),)
        block_bytes = Bt * bytes_per_batch
        vmem_limit = int(min(vmem_cap_limit,
                             max(16 << 20, 4 * block_bytes + 2 * param_bytes + (4 << 20))))
        out = pl.pallas_call(
            _make_fused_kernel(HW),
            out_shape=jax.ShapeDtypeStruct((B, C, HW), x.dtype),
            grid=grid,
            in_specs=[
                pl.BlockSpec((Bt, C, HW), lambda b: (b, 0, 0)),   # x batch tile (full C, full HW)
                pl.BlockSpec((C, hid), lambda b: (0, 0)),         # W1^T
                pl.BlockSpec((1, hid), lambda b: (0, 0)),         # b1 (row)
                pl.BlockSpec((hid, C), lambda b: (0, 0)),         # W2^T
                pl.BlockSpec((1, C), lambda b: (0, 0)),           # b2 (row)
            ],
            out_specs=pl.BlockSpec((Bt, C, HW), lambda b: (b, 0, 0)),
            compiler_params=pltpu.CompilerParams(
                dimension_semantics=("parallel",),
                vmem_limit_bytes=vmem_limit),
            cost_estimate=pl.CostEstimate(
                flops=int(3 * B * C * HW + 8 * B * C * hid),
                transcendentals=int(2 * B * C),
                bytes_accessed=int(2 * B * C * HW * itemsize + param_bytes)),
        )(x2, w1t, b1r, w2t, b2r)
        return out.reshape(B, C, H, W)

    # ---------------- chunked streaming path (large per-image slabs) ----------------
    Bt = 1
    HWc = max(128, (max_block_bytes // max(C * itemsize, 1)) // 128 * 128)
    HWc = min(HWc, (HW // 128) * 128)           # multiple of 128, not larger than the tensor
    n_chunks = pl.cdiv(HW, HWc)
    chunk_bytes = Bt * C * HWc * itemsize

    # Pass 1: streamed pooled reductions + MLP + sigmoid -> per-image channel scale (B, C, 1) f32.
    scale = pl.pallas_call(
        _make_scale_kernel(HW, HWc),
        out_shape=jax.ShapeDtypeStruct((B, C, 1), jnp.float32),
        grid=(pl.cdiv(B, Bt), n_chunks),
        in_specs=[
            pl.BlockSpec((Bt, C, HWc), lambda b, c: (b, 0, c)),
            pl.BlockSpec((C, hid), lambda b, c: (0, 0)),
            pl.BlockSpec((1, hid), lambda b, c: (0, 0)),
            pl.BlockSpec((hid, C), lambda b, c: (0, 0)),
            pl.BlockSpec((1, C), lambda b, c: (0, 0)),
        ],
        out_specs=pl.BlockSpec((Bt, C, 1), lambda b, c: (b, 0, 0)),
        scratch_shapes=[pltpu.VMEM((Bt, C), jnp.float32),     # running sum
                        pltpu.VMEM((Bt, C), jnp.float32)],    # running max
        compiler_params=pltpu.CompilerParams(
            dimension_semantics=("parallel", "arbitrary"),
            vmem_limit_bytes=int(min(vmem_cap_limit,
                                     max(16 << 20, 2 * chunk_bytes + 2 * param_bytes + (4 << 20))))),
        cost_estimate=pl.CostEstimate(
            flops=int(2 * B * C * HW + 8 * B * C * hid),
            transcendentals=int(2 * B * C),
            bytes_accessed=int(B * C * HW * itemsize + param_bytes)),
    )(x2, w1t, b1r, w2t, b2r)

    # Pass 2: apply the sigmoid scale chunk-by-chunk.
    out = pl.pallas_call(
        _apply_kernel,
        out_shape=jax.ShapeDtypeStruct((B, C, HW), x.dtype),
        grid=(pl.cdiv(B, Bt), n_chunks),
        in_specs=[
            pl.BlockSpec((Bt, C, 1), lambda b, c: (b, 0, 0)),
            pl.BlockSpec((Bt, C, HWc), lambda b, c: (b, 0, c)),
        ],
        out_specs=pl.BlockSpec((Bt, C, HWc), lambda b, c: (b, 0, c)),
        compiler_params=pltpu.CompilerParams(
            dimension_semantics=("parallel", "parallel"),
            vmem_limit_bytes=int(min(vmem_cap_limit,
                                     max(16 << 20, 4 * chunk_bytes + (4 << 20))))),
        cost_estimate=pl.CostEstimate(
            flops=int(B * C * HW),
            transcendentals=0,
            bytes_accessed=int(2 * B * C * HW * itemsize)),
    )(scale, x2)
    return out.reshape(B, C, H, W)


# ---------------------------------------------------------------------------
# Pure-JAX reference (matches the PyTorch forward with pool_types=['avg','max'])
# ---------------------------------------------------------------------------
def channel_gate_reference(x, w1, b1, w2, b2):
    B, C, H, W = x.shape
    xf = x.reshape(B, C, H * W).astype(jnp.float32)
    avg_pool = jnp.mean(xf, axis=2)      # (B, C)
    max_pool = jnp.max(xf, axis=2)       # (B, C)

    def mlp(p):
        h = jnp.maximum(p @ w1.T + b1, 0.0)
        return h @ w2.T + b2

    att = mlp(avg_pool) + mlp(max_pool)  # (B, C)
    scale = jax.nn.sigmoid(att)[:, :, None, None]
    return (x.astype(jnp.float32) * scale).astype(x.dtype)


if __name__ == "__main__":
    key = jax.random.PRNGKey(0)
    kx, kw1, kb1, kw2, kb2, kx2, kx3 = jax.random.split(key, 7)

    # gate_channels=32, reduction_ratio=16 -> hidden=2.
    C, reduction_ratio = 32, 16
    hid = C // reduction_ratio

    bound1 = float(1.0 / (C ** 0.5))
    bound2 = float(1.0 / (hid ** 0.5))
    w1 = jax.random.uniform(kw1, (hid, C), minval=-bound1, maxval=bound1, dtype=jnp.float32)
    b1 = jax.random.uniform(kb1, (hid,), minval=-bound1, maxval=bound1, dtype=jnp.float32)
    w2 = jax.random.uniform(kw2, (C, hid), minval=-bound2, maxval=bound2, dtype=jnp.float32)
    b2 = jax.random.uniform(kb2, (C,), minval=-bound2, maxval=bound2, dtype=jnp.float32)

    # Case 1: lane-aligned spatial dims (H*W = 256), B=2 -> fused path.
    x = jax.random.normal(kx, (2, C, 16, 16), dtype=jnp.float32)
    out = jax.block_until_ready(channel_gate(x, w1, b1, w2, b2))
    ref = channel_gate_reference(x, w1, b1, w2, b2)
    assert out.shape == x.shape and out.dtype == x.dtype
    assert jnp.allclose(out, ref, atol=1e-5, rtol=1e-5), "mismatch vs reference (aligned)"

    # Case 2: unaligned spatial dims (H*W = 225, no padding), B=4 -> fused path, ragged lanes.
    x2 = jax.random.normal(kx2, (4, C, 15, 15), dtype=jnp.float32)
    out2 = jax.block_until_ready(channel_gate(x2, w1, b1, w2, b2))
    ref2 = channel_gate_reference(x2, w1, b1, w2, b2)
    assert out2.shape == x2.shape and out2.dtype == x2.dtype
    assert jnp.allclose(out2, ref2, atol=1e-5, rtol=1e-5), "mismatch vs reference (unaligned)"

    # Case 3: force the chunked streaming fallback (H*W = 289 >= 256) with a tiny block budget.
    x3 = jax.random.normal(kx3, (2, C, 17, 17), dtype=jnp.float32)
    out3 = jax.block_until_ready(channel_gate(x3, w1, b1, w2, b2, max_block_bytes=16 << 10))
    ref3 = channel_gate_reference(x3, w1, b1, w2, b2)
    assert out3.shape == x3.shape and out3.dtype == x3.dtype
    assert jnp.allclose(out3, ref3, atol=1e-5, rtol=1e-5), "mismatch vs reference (chunked)"

    print("KERNEL_OK")
</pallas_src>

<mosaic_0001>
module attributes {stable_mosaic.version = 11 : i64} {
  func.func @kernel(%arg0: i32, %arg1: memref<2x32x256xf32, #tpu.memory_space<vmem>>, %arg2: memref<32x2xf32, #tpu.memory_space<vmem>>, %arg3: memref<1x2xf32, #tpu.memory_space<vmem>>, %arg4: memref<2x32xf32, #tpu.memory_space<vmem>>, %arg5: memref<1x32xf32, #tpu.memory_space<vmem>>, %arg6: memref<2x32x256xf32, #tpu.memory_space<vmem>>) attributes {dimension_semantics = [#tpu.dimension_semantics<parallel>], iteration_bounds = array<i64: 1>, scalar_prefetch = 0 : i64, scratch_operands = 0 : i64, tpu.core_type = #tpu.core_type<tc>, window_params = [{transform_indices = @transform_0, window_bounds = array<i64: 2, 32, 256>}, {pipeline_mode = #tpu.pipeline_mode<synchronous>, transform_indices = @transform_1, window_bounds = array<i64: 32, 2>}, {pipeline_mode = #tpu.pipeline_mode<synchronous>, transform_indices = @transform_2, window_bounds = array<i64: 1, 2>}, {pipeline_mode = #tpu.pipeline_mode<synchronous>, transform_indices = @transform_3, window_bounds = array<i64: 2, 32>}, {pipeline_mode = #tpu.pipeline_mode<synchronous>, transform_indices = @transform_4, window_bounds = array<i64: 1, 32>}, {transform_indices = @transform_5, window_bounds = array<i64: 2, 32, 256>}]} {
    %c0 = arith.constant 0 : index
    %c0_0 = arith.constant 0 : index
    %c0_1 = arith.constant 0 : index
    %0 = vector.load %arg1[%c0, %c0_0, %c0_1] : memref<2x32x256xf32, #tpu.memory_space<vmem>>, vector<2x32x256xf32>
    %cst = arith.constant dense<0.000000e+00> : vector<2x32xf32>
    %1 = vector.multi_reduction <add>, %0, %cst [2] : vector<2x32x256xf32> to vector<2x32xf32>
    %cst_2 = arith.constant 3.906250e-03 : f32
    %2 = vector.broadcast %cst_2 : f32 to vector<2x32xf32>
    %3 = arith.mulf %1, %2 : vector<2x32xf32>
    %cst_3 = arith.constant dense<0xFF800000> : vector<2x32xf32>
    %4 = vector.multi_reduction <maximumf>, %0, %cst_3 [2] : vector<2x32x256xf32> to vector<2x32xf32>
    %c0_4 = arith.constant 0 : index
    %c0_5 = arith.constant 0 : index
    %5 = vector.load %arg2[%c0_4, %c0_5] : memref<32x2xf32, #tpu.memory_space<vmem>>, vector<32x2xf32>
    %cst_6 = arith.constant dense<0.000000e+00> : vector<2x2xf32>
    %6 = tpu.matmul %3, %5, %cst_6 {dimension_numbers = #tpu.dot_dimension_numbers<[1], [0], [0], [1], [0, 0, 1, 1], [], []>} : vector<2x32xf32>, vector<32x2xf32>, vector<2x2xf32> -> vector<2x2xf32>
    %c0_7 = arith.constant 0 : index
    %c0_8 = arith.constant 0 : index
    %7 = vector.load %arg3[%c0_7, %c0_8] : memref<1x2xf32, #tpu.memory_space<vmem>>, vector<1x2xf32>
    %8 = vector.broadcast %7 : vector<1x2xf32> to vector<2x2xf32>
    %9 = arith.addf %6, %8 : vector<2x2xf32>
    %cst_9 = arith.constant 0.000000e+00 : f32
    %10 = vector.broadcast %cst_9 : f32 to vector<2x2xf32>
    %11 = arith.maximumf %9, %10 : vector<2x2xf32>
    %c0_10 = arith.constant 0 : index
    %c0_11 = arith.constant 0 : index
    %12 = vector.load %arg4[%c0_10, %c0_11] : memref<2x32xf32, #tpu.memory_space<vmem>>, vector<2x32xf32>
    %cst_12 = arith.constant dense<0.000000e+00> : vector<2x32xf32>
    %13 = tpu.matmul %11, %12, %cst_12 {dimension_numbers = #tpu.dot_dimension_numbers<[1], [0], [0], [1], [0, 0, 1, 1], [], []>} : vector<2x2xf32>, vector<2x32xf32>, vector<2x32xf32> -> vector<2x32xf32>
    %c0_13 = arith.constant 0 : index
    %c0_14 = arith.constant 0 : index
    %14 = vector.load %arg5[%c0_13, %c0_14] : memref<1x32xf32, #tpu.memory_space<vmem>>, vector<1x32xf32>
    %15 = vector.broadcast %14 : vector<1x32xf32> to vector<2x32xf32>
    %16 = arith.addf %13, %15 : vector<2x32xf32>
    %c0_15 = arith.constant 0 : index
    %c0_16 = arith.constant 0 : index
    %17 = vector.load %arg2[%c0_15, %c0_16] : memref<32x2xf32, #tpu.memory_space<vmem>>, vector<32x2xf32>
    %cst_17 = arith.constant dense<0.000000e+00> : vector<2x2xf32>
    %18 = tpu.matmul %4, %17, %cst_17 {dimension_numbers = #tpu.dot_dimension_numbers<[1], [0], [0], [1], [0, 0, 1, 1], [], []>} : vector<2x32xf32>, vector<32x2xf32>, vector<2x2xf32> -> vector<2x2xf32>
    %c0_18 = arith.constant 0 : index
    %c0_19 = arith.constant 0 : index
    %19 = vector.load %arg3[%c0_18, %c0_19] : memref<1x2xf32, #tpu.memory_space<vmem>>, vector<1x2xf32>
    %20 = vector.broadcast %19 : vector<1x2xf32> to vector<2x2xf32>
    %21 = arith.addf %18, %20 : vector<2x2xf32>
    %cst_20 = arith.constant 0.000000e+00 : f32
    %22 = vector.broadcast %cst_20 : f32 to vector<2x2xf32>
    %23 = arith.maximumf %21, %22 : vector<2x2xf32>
    %c0_21 = arith.constant 0 : index
    %c0_22 = arith.constant 0 : index
    %24 = vector.load %arg4[%c0_21, %c0_22] : memref<2x32xf32, #tpu.memory_space<vmem>>, vector<2x32xf32>
    %cst_23 = arith.constant dense<0.000000e+00> : vector<2x32xf32>
    %25 = tpu.matmul %23, %24, %cst_23 {dimension_numbers = #tpu.dot_dimension_numbers<[1], [0], [0], [1], [0, 0, 1, 1], [], []>} : vector<2x2xf32>, vector<2x32xf32>, vector<2x32xf32> -> vector<2x32xf32>
    %c0_24 = arith.constant 0 : index
    %c0_25 = arith.constant 0 : index
    %26 = vector.load %arg5[%c0_24, %c0_25] : memref<1x32xf32, #tpu.memory_space<vmem>>, vector<1x32xf32>
    %27 = vector.broadcast %26 : vector<1x32xf32> to vector<2x32xf32>
    %28 = arith.addf %25, %27 : vector<2x32xf32>
    %29 = arith.addf %16, %28 : vector<2x32xf32>
    %30 = arith.negf %29 : vector<2x32xf32>
    %31 = math.exp %30 : vector<2x32xf32>
    %cst_26 = arith.constant 1.000000e+00 : f32
    %32 = vector.broadcast %cst_26 : f32 to vector<2x32xf32>
    %33 = arith.addf %32, %31 : vector<2x32xf32>
    %34 = arith.divf %32, %33 : vector<2x32xf32>
    %35 = vector.shape_cast %34 : vector<2x32xf32> to vector<2x32x1xf32>
    %36 = vector.broadcast %35 : vector<2x32x1xf32> to vector<2x32x256xf32>
    %37 = arith.mulf %0, %36 : vector<2x32x256xf32>
    %c0_27 = arith.constant 0 : index
    %c0_28 = arith.constant 0 : index
    %c0_29 = arith.constant 0 : index
    %38 = vector.load %arg6[%c0_27, %c0_28, %c0_29] : memref<2x32x256xf32, #tpu.memory_space<vmem>>, vector<2x32x256xf32>
    tpu.vector_store %arg6[%c0_27, %c0_28, %c0_29], %37 {strides = array<i32>} : memref<2x32x256xf32, #tpu.memory_space<vmem>>, vector<2x32x256xf32>,
    return
  }
  func.func @transform_0(%arg0: i32) -> (i32, i32, i32) {
    %c0_i32 = arith.constant 0 : i32
    %c0_i32_0 = arith.constant 0 : i32
    %c0_i32_1 = arith.constant 0 : i32
    return %arg0, %c0_i32, %c0_i32_0 : i32, i32, i32
  }
  func.func @transform_1(%arg0: i32) -> (i32, i32) {
    %c0_i32 = arith.constant 0 : i32
    %c0_i32_0 = arith.constant 0 : i32
    %c0_i32_1 = arith.constant 0 : i32
    return %c0_i32, %c0_i32_0 : i32, i32
  }
  func.func @transform_2(%arg0: i32) -> (i32, i32) {
    %c0_i32 = arith.constant 0 : i32
    %c0_i32_0 = arith.constant 0 : i32
    %c0_i32_1 = arith.constant 0 : i32
    return %c0_i32, %c0_i32_0 : i32, i32
  }
  func.func @transform_3(%arg0: i32) -> (i32, i32) {
    %c0_i32 = arith.constant 0 : i32
    %c0_i32_0 = arith.constant 0 : i32
    %c0_i32_1 = arith.constant 0 : i32
    return %c0_i32, %c0_i32_0 : i32, i32
  }
  func.func @transform_4(%arg0: i32) -> (i32, i32) {
    %c0_i32 = arith.constant 0 : i32
    %c0_i32_0 = arith.constant 0 : i32
    %c0_i32_1 = arith.constant 0 : i32
    return %c0_i32, %c0_i32_0 : i32, i32
  }
  func.func @transform_5(%arg0: i32) -> (i32, i32, i32) {
    %c0_i32 = arith.constant 0 : i32
    %c0_i32_0 = arith.constant 0 : i32
    %c0_i32_1 = arith.constant 0 : i32
    return %arg0, %c0_i32, %c0_i32_0 : i32, i32, i32
  }
}

</mosaic_0001>

<llo_original>
// kernel: tpu_custom_call.1
$region0: #{tpu_custom_call.1}
  #allocation0 [shape = 'u32[]', space=smem, size = 0x4, offset = 0x4, fixed_abs, tag = 'smem constant byte address 0x4 - core index']
  #allocation1 [shape = 'u32[144,128]{1,0:T(1,128)}', space=vmem, size = 0x12000, scoped, tag = 'internal scratch']
  %s0 = inlined_call_operand.hbm [shape: f32[2,32,256], index: 0, kind: input, shape index: {}]
  %s1 = inlined_call_operand.vmem [shape: f32[32,2], index: 1, kind: input, shape index: {}]
  %s2 = inlined_call_operand.vmem [shape: f32[1,2], index: 2, kind: input, shape index: {}]
  %s3 = inlined_call_operand.vmem [shape: f32[2,32], index: 3, kind: input, shape index: {}]
  %s4 = inlined_call_operand.vmem [shape: f32[1,32], index: 4, kind: input, shape index: {}]
  %s5 = inlined_call_operand.hbm [shape: f32[2,32,256], index: 5, kind: output, shape index: {}]
  %s6 = sld [smem:[#allocation0]]
  $region34: #{tpu_custom_call.1} parent=0
    _
  %s8 = ssub.s32 1, %s6
  %s9 = scalar_select 0, %s8, %s6
  $region1: #{tpu_custom_call.1} parent=0
    #allocation2 [shape = 'u8[65536]{0}', space=vmem, size = 0x10000, scoped, tag = 'input window, operand 0, single buffered']
    #allocation3 [shape = 's32[1]{0}', space=sflag, size = 0x4, scoped, tag = 'scoped memory for tpu_custom_call.1']
    #allocation4 [shape = 's32[1]{0}', space=sflag, size = 0x4, scoped, tag = 'scoped memory for tpu_custom_call.1']
    #allocation5 [shape = 'u8[65536]{0}', space=vmem, size = 0x10000, scoped, tag = 'output window, operand 0, single buffered']
    %10 = vsyncpa [#allocation3], 0
    %11 = vsyncpa [#allocation4], 0
    // Predicated region
    $region2: #{tpu_custom_call.1} parent=1 // pred_check
      _
    $region3: #{tpu_custom_call.1} parent=1 // pred_check_branch
      %13 = sbr.rel (0) target = $region5
    $region4: #{tpu_custom_call.1} parent=1 // pred_region
      %s15 = ssub.s32 2048, 2048
      %16 = vsyncadd [#allocation3], %s15
      %s17 = sshll.u32 [#allocation2], 4
      %s18 = int_to_ptr.vmem [resolvable:$true] %s17
      %23 = dma.hbm_to_vmem [thread:$0]  %s0, 2048, %s18, [#allocation3], 256, 256, 16
    $region5: #{tpu_custom_call.1} parent=1 // pred_fallthru
      _
    // Predicated region
    $region6: #{tpu_custom_call.1} parent=1 // pred_check
      _
    $region7: #{tpu_custom_call.1} parent=1 // pred_check_branch
      %25 = sbr.rel (0) target = $region9
    $region8: #{tpu_custom_call.1} parent=1 // pred_region
      _
    $region9: #{tpu_custom_call.1} parent=1 // pred_fallthru
      _
    // Predicated region
    $region10: #{tpu_custom_call.1} parent=1 // pred_check
      _
    $region11: #{tpu_custom_call.1} parent=1 // pred_check_branch
      %27 = sbr.rel (0) target = $region13
    $region12: #{tpu_custom_call.1} parent=1 // pred_region
      _
    $region13: #{tpu_custom_call.1} parent=1 // pred_fallthru
      _
    // Predicated region
    $region14: #{tpu_custom_call.1} parent=1 // pred_check
      _
    $region15: #{tpu_custom_call.1} parent=1 // pred_check_branch
      %29 = sbr.rel (0) target = $region17
    $region16: #{tpu_custom_call.1} parent=1 // pred_region
      _
    $region17: #{tpu_custom_call.1} parent=1 // pred_fallthru
      _
    // Predicated region
    $region18: #{tpu_custom_call.1} parent=1 // pred_check
      _
    $region19: #{tpu_custom_call.1} parent=1 // pred_check_branch
      %31 = sbr.rel (0) target = $region21
    $region20: #{tpu_custom_call.1} parent=1 // pred_region
      _
    $region21: #{tpu_custom_call.1} parent=1 // pred_fallthru
      _
    // Predicated region
    $region22: #{tpu_custom_call.1} parent=1 // pred_check
      _
    $region23: #{tpu_custom_call.1} parent=1 // pred_check_branch
      %33 = sbr.rel (0) target = $region25
    $region24: #{tpu_custom_call.1} parent=1 // pred_region
      %34 = dma.done [#allocation3], 2048
    $region25: #{tpu_custom_call.1} parent=1 // pred_fallthru
      _
    %v35 = vld [vmem:[#allocation2] sm:$0xff]
    %v36 = vld [vmem:[#allocation2 + $0x8] sm:$0xff]
    %v37 = vld [vmem:[#allocation2 + $0x10] sm:$0xff]
    %v38 = vld [vmem:[#allocation2 + $0x18] sm:$0xff]
    %v39 = vld [vmem:[#allocation2 + $0x20] sm:$0xff]
    %v40 = vld [vmem:[#allocation2 + $0x28] sm:$0xff]
    %v41 = vld [vmem:[#allocation2 + $0x30] sm:$0xff]
    %v42 = vld [vmem:[#allocation2 + $0x38] sm:$0xff]
    %v43 = vld [vmem:[#allocation2 + $0x40] sm:$0xff]
    %v44 = vld [vmem:[#allocation2 + $0x48] sm:$0xff]
    %v45 = vld [vmem:[#allocation2 + $0x50] sm:$0xff]
    %v46 = vld [vmem:[#allocation2 + $0x58] sm:$0xff]
    %v47 = vld [vmem:[#allocation2 + $0x60] sm:$0xff]
    %v48 = vld [vmem:[#allocation2 + $0x68] sm:$0xff]
    %v49 = vld [vmem:[#allocation2 + $0x70] sm:$0xff]
    %v50 = vld [vmem:[#allocation2 + $0x78] sm:$0xff]
    %v51 = vadd.f32 %v35, %v36
    %52 = vadd.xlane.f32.xlu0 %v51
    %v53 = vpop.xlane.xlu0 %52
    %v54 = vadd.f32 %v37, %v38
    %55 = vadd.xlane.f32.xlu0 %v54
    %v56 = vpop.xlane.xlu0 %55
    %v57 = vadd.f32 %v39, %v40
    %58 = vadd.xlane.f32.xlu0 %v57
    %v59 = vpop.xlane.xlu0 %58
    %v60 = vadd.f32 %v41, %v42
    %61 = vadd.xlane.f32.xlu0 %v60
    %v62 = vpop.xlane.xlu0 %61
    %v63 = vadd.f32 %v43, %v44
    %64 = vadd.xlane.f32.xlu0 %v63
    %v65 = vpop.xlane.xlu0 %64
    %v66 = vadd.f32 %v45, %v46
    %67 = vadd.xlane.f32.xlu0 %v66
    %v68 = vpop.xlane.xlu0 %67
    %v69 = vadd.f32 %v47, %v48
    %70 = vadd.xlane.f32.xlu0 %v69
    %v71 = vpop.xlane.xlu0 %70
    %v72 = vadd.f32 %v49, %v50
    %73 = vadd.xlane.f32.xlu0 %v72
    %v74 = vpop.xlane.xlu0 %73
    %v75 = vmul.f32 %v53, 0.00390625
    %v76 = vmul.f32 %v56, 0.00390625
    %v77 = vmul.f32 %v59, 0.00390625
    %v78 = vmul.f32 %v62, 0.00390625
    %v79 = vmul.f32 %v65, 0.00390625
    %v80 = vmul.f32 %v68, 0.00390625
    %v81 = vmul.f32 %v71, 0.00390625
    %v82 = vmul.f32 %v74, 0.00390625
    %v83 = vmax.f32 %v35, %v36
    %84 = vmax.xlane.f32.xlu0 %v83
    %v85 = vpop.xlane.xlu0 %84
    %v86 = vmax.f32 %v37, %v38
    %87 = vmax.xlane.f32.xlu0 %v86
    %v88 = vpop.xlane.xlu0 %87
    %v89 = vmax.f32 %v39, %v40
    %90 = vmax.xlane.f32.xlu0 %v89
    %v91 = vpop.xlane.xlu0 %90
    %v92 = vmax.f32 %v41, %v42
    %93 = vmax.xlane.f32.xlu0 %v92
    %v94 = vpop.xlane.xlu0 %93
    %v95 = vmax.f32 %v43, %v44
    %96 = vmax.xlane.f32.xlu0 %v95
    %v97 = vpop.xlane.xlu0 %96
    %v98 = vmax.f32 %v45, %v46
    %99 = vmax.xlane.f32.xlu0 %v98
    %v100 = vpop.xlane.xlu0 %99
    %v101 = vmax.f32 %v47, %v48
    %102 = vmax.xlane.f32.xlu0 %v101
    %v103 = vpop.xlane.xlu0 %102
    %v104 = vmax.f32 %v49, %v50
    %105 = vmax.xlane.f32.xlu0 %v104
    %v106 = vpop.xlane.xlu0 %105
    %v107 = vld [vmem:[%s1] sm:$0xff]
    %v108 = vld [vmem:[%s1 + $0x8] sm:$0xff]
    %v109 = vld [vmem:[%s1 + $0x10] sm:$0xff]
    %v110 = vld [vmem:[%s1 + $0x18] sm:$0xff]
    %v111 = vld [vmem:[%s2] sm:$0x1]
    %v113 = vlaneseq
    %v114 = vshrl.u32 %v113, 7
    %v115 = vsub.s32 0, %v114
    %v116 = vrot.slane %v111, %v115
    %v126 = vlaneseq
    %v127 = vand.u32 %v126, 127
    %v128 = vlaneseq
    %v129 = vshrl.u32 %v128, 7
    %v130 = vsub.s32 %v127, %v129
    %v131 = vrot.slane %v75, %v130
    %v132 = vadd.s32 %v127, 4294967288
    %v133 = vlaneseq
    %v134 = vshrl.u32 %v133, 7
    %v135 = vsub.s32 %v132, %v134
    %v136 = vrot.slane %v76, %v135
    %vm137 = vcmask 130112
    %v138 = vsel %vm137, %v136, %v131
    %v139 = vadd.s32 %v127, 4294967280
    %v140 = vlaneseq
    %v141 = vshrl.u32 %v140, 7
    %v142 = vsub.s32 %v139, %v141
    %v143 = vrot.slane %v77, %v142
    %vm144 = vcmask 195712
    %v145 = vsel %vm144, %v143, %v138
    %v146 = vadd.s32 %v127, 4294967272
    %v147 = vlaneseq
    %v148 = vshrl.u32 %v147, 7
    %v149 = vsub.s32 %v146, %v148
    %v150 = vrot.slane %v78, %v149
    %vm151 = vcmask 261312
    %v152 = vsel %vm151, %v150, %v145
    %v153 = vlaneseq
    %v154 = vshrl.u32 %v153, 7
    %v155 = vsub.s32 %v127, %v154
    %v156 = vrot.slane %v79, %v155
    %v157 = vlaneseq
    %v158 = vshrl.u32 %v157, 7
    %v159 = vsub.s32 %v132, %v158
    %v160 = vrot.slane %v80, %v159
    %v161 = vsel %vm137, %v160, %v156
    %v162 = vlaneseq
    %v163 = vshrl.u32 %v162, 7
    %v164 = vsub.s32 %v139, %v163
    %v165 = vrot.slane %v81, %v164
    %v166 = vsel %vm144, %v165, %v161
    %v167 = vlaneseq
    %v168 = vshrl.u32 %v167, 7
    %v169 = vsub.s32 %v146, %v168
    %v170 = vrot.slane %v82, %v169
    %v171 = vsel %vm151, %v170, %v166
    %vm172 = vcmask 1041409
    %v173 = vsel %vm172, %v171, %v152
    %vm174 = vcmask 261120
    %v175 = vsel %vm174, %v173, 0
    %177 = vmatprep.subr.mxu0 0.0
    %178 = vmatpush1.msra.mxu0 %v107
    %179 = vmatprep.subr.mxu0 0.0
    %180 = vmatpush1.msra.mxu0 %v108
    %181 = vmatprep.subr.mxu0 0.0
    %182 = vmatpush1.msra.mxu0 %v109
    %183 = vmatprep.subr.mxu0 0.0
    %184 = vmatpush1.msra.mxu0 %v110
    %185 = vmatprep.subr.mxu0 0.0
    %186 = vmatpush1.msra.mxu0 0.0
    %187 = vmatprep.subr.mxu0 0.0
    %188 = vmatpush1.msra.mxu0 0.0
    %189 = vmatprep.subr.mxu0 0.0
    %190 = vmatpush1.msra.mxu0 0.0
    %191 = vmatprep.subr.mxu0 0.0
    %192 = vmatpush1.msra.mxu0 0.0
    %193 = vmatprep.subr.mxu0 0.0
    %194 = vmatpush1.msra.mxu0 0.0
    %195 = vmatprep.subr.mxu0 0.0
    %196 = vmatpush1.msra.mxu0 0.0
    %197 = vmatprep.subr.mxu0 0.0
    %198 = vmatpush1.msra.mxu0 0.0
    %199 = vmatprep.subr.mxu0 0.0
    %200 = vmatpush1.msra.mxu0 0.0
    %201 = vmatprep.subr.mxu0 0.0
    %202 = vmatpush1.msra.mxu0 0.0
    %203 = vmatprep.subr.mxu0 0.0
    %204 = vmatpush1.msra.mxu0 0.0
    %205 = vmatprep.subr.mxu0 0.0
    %206 = vmatpush1.msra.mxu0 0.0
    %207 = vmatprep.subr.mxu0 0.0
    %208 = vmatpush1.msra.mxu0 0.0
    %209 = vmatprep.subr.mxu0 0.0
    %210 = vmatpush1.msra.mxu0 0.0
    %211 = vmatprep.subr.mxu0 0.0
    %212 = vmatpush1.msra.mxu0 0.0
    %213 = vmatprep.subr.mxu0 0.0
    %214 = vmatpush1.msra.mxu0 0.0
    %215 = vmatprep.subr.mxu0 0.0
    %216 = vmatpush1.msra.mxu0 0.0
    %217 = vmatprep.subr.mxu0 0.0
    %218 = vmatpush1.msra.mxu0 0.0
    %219 = vmatprep.subr.mxu0 0.0
    %220 = vmatpush1.msra.mxu0 0.0
    %221 = vmatprep.subr.mxu0 0.0
    %222 = vmatpush1.msra.mxu0 0.0
    %223 = vmatprep.subr.mxu0 0.0
    %224 = vmatpush1.msra.mxu0 0.0
    %225 = vmatprep.subr.mxu0 0.0
    %226 = vmatpush1.msra.mxu0 0.0
    %227 = vmatprep.subr.mxu0 0.0
    %228 = vmatpush1.msra.mxu0 0.0
    %229 = vmatprep.subr.mxu0 0.0
    %230 = vmatpush1.msra.mxu0 0.0
    %231 = vmatprep.subr.mxu0 0.0
    %232 = vmatpush1.msra.mxu0 0.0
    %233 = vmatprep.subr.mxu0 0.0
    %234 = vmatpush1.msra.mxu0 0.0
    %235 = vmatprep.subr.mxu0 0.0
    %236 = vmatpush1.msra.mxu0 0.0
    %237 = vmatprep.subr.mxu0 0.0
    %238 = vmatpush1.msra.mxu0 0.0
    %239 = vmatprep.subr.mxu0 0.0
    %240 = vmatpush1.msra.mxu0 0.0
    %241 = vmatprep.mubr.f32.mxu0 0.0
    %242 = vmatmul.mubr.f32.gmra.mrb[0].mxu0 %v175
    %v243 = vpop.f32.mrb[0].mxu0
    %v244 = vadd.f32 %v116, %v243
    %v245 = vpop.f32.mrb[0].mxu0
    %246 = vdwg.mxu0
    %v247 = vmax.f32 %v244, 0.0
    %v248 = vld [vmem:[%s3] sm:$0x3]
    %v249 = vld [vmem:[%s4] sm:$0x1]
    %v251 = vlaneseq
    %v252 = vshrl.u32 %v251, 7
    %v253 = vsub.s32 0, %v252
    %v254 = vrot.slane %v249, %v253
    %vm256 = vcmask 15360
    %v258 = vsel %vm256, %v247, 0
    %vm260 = vcmask 1041408
    %v262 = vsel %vm260, %v248, 0
    %264 = vmatprep.subr.mxu0 0.0
    %265 = vmatpush1.msra.mxu0 %v262
    %266 = vmatprep.subr.mxu0 0.0
    %267 = vmatpush1.msra.mxu0 0.0
    %268 = vmatprep.subr.mxu0 0.0
    %269 = vmatpush1.msra.mxu0 0.0
    %270 = vmatprep.subr.mxu0 0.0
    %271 = vmatpush1.msra.mxu0 0.0
    %272 = vmatprep.subr.mxu0 0.0
    %273 = vmatpush1.msra.mxu0 0.0
    %274 = vmatprep.subr.mxu0 0.0
    %275 = vmatpush1.msra.mxu0 0.0
    %276 = vmatprep.subr.mxu0 0.0
    %277 = vmatpush1.msra.mxu0 0.0
    %278 = vmatprep.subr.mxu0 0.0
    %279 = vmatpush1.msra.mxu0 0.0
    %280 = vmatprep.subr.mxu0 0.0
    %281 = vmatpush1.msra.mxu0 0.0
    %282 = vmatprep.subr.mxu0 0.0
    %283 = vmatpush1.msra.mxu0 0.0
    %284 = vmatprep.subr.mxu0 0.0
    %285 = vmatpush1.msra.mxu0 0.0
    %286 = vmatprep.subr.mxu0 0.0
    %287 = vmatpush1.msra.mxu0 0.0
    %288 = vmatprep.subr.mxu0 0.0
    %289 = vmatpush1.msra.mxu0 0.0
    %290 = vmatprep.subr.mxu0 0.0
    %291 = vmatpush1.msra.mxu0 0.0
    %292 = vmatprep.subr.mxu0 0.0
    %293 = vmatpush1.msra.mxu0 0.0
    %294 = vmatprep.subr.mxu0 0.0
    %295 = vmatpush1.msra.mxu0 0.0
    %296 = vmatprep.subr.mxu0 0.0
    %297 = vmatpush1.msra.mxu0 0.0
    %298 = vmatprep.subr.mxu0 0.0
    %299 = vmatpush1.msra.mxu0 0.0
    %300 = vmatprep.subr.mxu0 0.0
    %301 = vmatpush1.msra.mxu0 0.0
    %302 = vmatprep.subr.mxu0 0.0
    %303 = vmatpush1.msra.mxu0 0.0
    %304 = vmatprep.subr.mxu0 0.0
    %305 = vmatpush1.msra.mxu0 0.0
    %306 = vmatprep.subr.mxu0 0.0
    %307 = vmatpush1.msra.mxu0 0.0
    %308 = vmatprep.subr.mxu0 0.0
    %309 = vmatpush1.msra.mxu0 0.0
    %310 = vmatprep.subr.mxu0 0.0
    %311 = vmatpush1.msra.mxu0 0.0
    %312 = vmatprep.subr.mxu0 0.0
    %313 = vmatpush1.msra.mxu0 0.0
    %314 = vmatprep.subr.mxu0 0.0
    %315 = vmatpush1.msra.mxu0 0.0
    %316 = vmatprep.subr.mxu0 0.0
    %317 = vmatpush1.msra.mxu0 0.0
    %318 = vmatprep.subr.mxu0 0.0
    %319 = vmatpush1.msra.mxu0 0.0
    %320 = vmatprep.subr.mxu0 0.0
    %321 = vmatpush1.msra.mxu0 0.0
    %322 = vmatprep.subr.mxu0 0.0
    %323 = vmatpush1.msra.mxu0 0.0
    %324 = vmatprep.subr.mxu0 0.0
    %325 = vmatpush1.msra.mxu0 0.0
    %326 = vmatprep.subr.mxu0 0.0
    %327 = vmatpush1.msra.mxu0 0.0
    %328 = vmatprep.mubr.f32.mxu0 0.0
    %329 = vmatmul.mubr.f32.gmra.mrb[0].mxu0 %v258
    %v330 = vpop.f32.mrb[0].mxu0
    %v331 = vadd.f32 %v254, %v330
    %v332 = vpop.f32.mrb[0].mxu0
    %333 = vdwg.mxu0
    %v342 = vlaneseq
    %v343 = vshrl.u32 %v342, 7
    %v344 = vsub.s32 %v127, %v343
    %v345 = vrot.slane %v85, %v344
    %v346 = vlaneseq
    %v347 = vshrl.u32 %v346, 7
    %v348 = vsub.s32 %v132, %v347
    %v349 = vrot.slane %v88, %v348
    %v350 = vsel %vm137, %v349, %v345
    %v351 = vlaneseq
    %v352 = vshrl.u32 %v351, 7
    %v353 = vsub.s32 %v139, %v352
    %v354 = vrot.slane %v91, %v353
    %v355 = vsel %vm144, %v354, %v350
    %v356 = vlaneseq
    %v357 = vshrl.u32 %v356, 7
    %v358 = vsub.s32 %v146, %v357
    %v359 = vrot.slane %v94, %v358
    %v360 = vsel %vm151, %v359, %v355
    %v361 = vlaneseq
    %v362 = vshrl.u32 %v361, 7
    %v363 = vsub.s32 %v127, %v362
    %v364 = vrot.slane %v97, %v363
    %v365 = vlaneseq
    %v366 = vshrl.u32 %v365, 7
    %v367 = vsub.s32 %v132, %v366
    %v368 = vrot.slane %v100, %v367
    %v369 = vsel %vm137, %v368, %v364
    %v370 = vlaneseq
    %v371 = vshrl.u32 %v370, 7
    %v372 = vsub.s32 %v139, %v371
    %v373 = vrot.slane %v103, %v372
    %v374 = vsel %vm144, %v373, %v369
    %v375 = vlaneseq
    %v376 = vshrl.u32 %v375, 7
    %v377 = vsub.s32 %v146, %v376
    %v378 = vrot.slane %v106, %v377
    %v379 = vsel %vm151, %v378, %v374
    %v380 = vsel %vm172, %v379, %v360
    %v381 = vsel %vm174, %v380, 0
    %383 = vmatprep.subr.mxu0 0.0
    %384 = vmatpush1.msra.mxu0 %v107
    %385 = vmatprep.subr.mxu0 0.0
    %386 = vmatpush1.msra.mxu0 %v108
    %387 = vmatprep.subr.mxu0 0.0
    %388 = vmatpush1.msra.mxu0 %v109
    %389 = vmatprep.subr.mxu0 0.0
    %390 = vmatpush1.msra.mxu0 %v110
    %391 = vmatprep.subr.mxu0 0.0
    %392 = vmatpush1.msra.mxu0 0.0
    %393 = vmatprep.subr.mxu0 0.0
    %394 = vmatpush1.msra.mxu0 0.0
    %395 = vmatprep.subr.mxu0 0.0
    %396 = vmatpush1.msra.mxu0 0.0
    %397 = vmatprep.subr.mxu0 0.0
    %398 = vmatpush1.msra.mxu0 0.0
    %399 = vmatprep.subr.mxu0 0.0
    %400 = vmatpush1.msra.mxu0 0.0
    %401 = vmatprep.subr.mxu0 0.0
    %402 = vmatpush1.msra.mxu0 0.0
    %403 = vmatprep.subr.mxu0 0.0
    %404 = vmatpush1.msra.mxu0 0.0
    %405 = vmatprep.subr.mxu0 0.0
    %406 = vmatpush1.msra.mxu0 0.0
    %407 = vmatprep.subr.mxu0 0.0
    %408 = vmatpush1.msra.mxu0 0.0
    %409 = vmatprep.subr.mxu0 0.0
    %410 = vmatpush1.msra.mxu0 0.0
    %411 = vmatprep.subr.mxu0 0.0
    %412 = vmatpush1.msra.mxu0 0.0
    %413 = vmatprep.subr.mxu0 0.0
    %414 = vmatpush1.msra.mxu0 0.0
    %415 = vmatprep.subr.mxu0 0.0
    %416 = vmatpush1.msra.mxu0 0.0
    %417 = vmatprep.subr.mxu0 0.0
    %418 = vmatpush1.msra.mxu0 0.0
    %419 = vmatprep.subr.mxu0 0.0
    %420 = vmatpush1.msra.mxu0 0.0
    %421 = vmatprep.subr.mxu0 0.0
    %422 = vmatpush1.msra.mxu0 0.0
    %423 = vmatprep.subr.mxu0 0.0
    %424 = vmatpush1.msra.mxu0 0.0
    %425 = vmatprep.subr.mxu0 0.0
    %426 = vmatpush1.msra.mxu0 0.0
    %427 = vmatprep.subr.mxu0 0.0
    %428 = vmatpush1.msra.mxu0 0.0
    %429 = vmatprep.subr.mxu0 0.0
    %430 = vmatpush1.msra.mxu0 0.0
    %431 = vmatprep.subr.mxu0 0.0
    %432 = vmatpush1.msra.mxu0 0.0
    %433 = vmatprep.subr.mxu0 0.0
    %434 = vmatpush1.msra.mxu0 0.0
    %435 = vmatprep.subr.mxu0 0.0
    %436 = vmatpush1.msra.mxu0 0.0
    %437 = vmatprep.subr.mxu0 0.0
    %438 = vmatpush1.msra.mxu0 0.0
    %439 = vmatprep.subr.mxu0 0.0
    %440 = vmatpush1.msra.mxu0 0.0
    %441 = vmatprep.subr.mxu0 0.0
    %442 = vmatpush1.msra.mxu0 0.0
    %443 = vmatprep.subr.mxu0 0.0
    %444 = vmatpush1.msra.mxu0 0.0
    %445 = vmatprep.subr.mxu0 0.0
    %446 = vmatpush1.msra.mxu0 0.0
    %447 = vmatprep.mubr.f32.mxu0 0.0
    %448 = vmatmul.mubr.f32.gmra.mrb[0].mxu0 %v381
    %v449 = vpop.f32.mrb[0].mxu0
    %v450 = vadd.f32 %v116, %v449
    %v451 = vpop.f32.mrb[0].mxu0
    %452 = vdwg.mxu0
    %v453 = vmax.f32 %v450, 0.0
    %v455 = vsel %vm256, %v453, 0
    %457 = vmatprep.subr.mxu0 0.0
    %458 = vmatpush1.msra.mxu0 %v262
    %459 = vmatprep.subr.mxu0 0.0
    %460 = vmatpush1.msra.mxu0 0.0
    %461 = vmatprep.subr.mxu0 0.0
    %462 = vmatpush1.msra.mxu0 0.0
    %463 = vmatprep.subr.mxu0 0.0
    %464 = vmatpush1.msra.mxu0 0.0
    %465 = vmatprep.subr.mxu0 0.0
    %466 = vmatpush1.msra.mxu0 0.0
    %467 = vmatprep.subr.mxu0 0.0
    %468 = vmatpush1.msra.mxu0 0.0
    %469 = vmatprep.subr.mxu0 0.0
    %470 = vmatpush1.msra.mxu0 0.0
    %471 = vmatprep.subr.mxu0 0.0
    %472 = vmatpush1.msra.mxu0 0.0
    %473 = vmatprep.subr.mxu0 0.0
    %474 = vmatpush1.msra.mxu0 0.0
    %475 = vmatprep.subr.mxu0 0.0
    %476 = vmatpush1.msra.mxu0 0.0
    %477 = vmatprep.subr.mxu0 0.0
    %478 = vmatpush1.msra.mxu0 0.0
    %479 = vmatprep.subr.mxu0 0.0
    %480 = vmatpush1.msra.mxu0 0.0
    %481 = vmatprep.subr.mxu0 0.0
    %482 = vmatpush1.msra.mxu0 0.0
    %483 = vmatprep.subr.mxu0 0.0
    %484 = vmatpush1.msra.mxu0 0.0
    %485 = vmatprep.subr.mxu0 0.0
    %486 = vmatpush1.msra.mxu0 0.0
    %487 = vmatprep.subr.mxu0 0.0
    %488 = vmatpush1.msra.mxu0 0.0
    %489 = vmatprep.subr.mxu0 0.0
    %490 = vmatpush1.msra.mxu0 0.0
    %491 = vmatprep.subr.mxu0 0.0
    %492 = vmatpush1.msra.mxu0 0.0
    %493 = vmatprep.subr.mxu0 0.0
    %494 = vmatpush1.msra.mxu0 0.0
    %495 = vmatprep.subr.mxu0 0.0
    %496 = vmatpush1.msra.mxu0 0.0
    %497 = vmatprep.subr.mxu0 0.0
    %498 = vmatpush1.msra.mxu0 0.0
    %499 = vmatprep.subr.mxu0 0.0
    %500 = vmatpush1.msra.mxu0 0.0
    %501 = vmatprep.subr.mxu0 0.0
    %502 = vmatpush1.msra.mxu0 0.0
    %503 = vmatprep.subr.mxu0 0.0
    %504 = vmatpush1.msra.mxu0 0.0
    %505 = vmatprep.subr.mxu0 0.0
    %506 = vmatpush1.msra.mxu0 0.0
    %507 = vmatprep.subr.mxu0 0.0
    %508 = vmatpush1.msra.mxu0 0.0
    %509 = vmatprep.subr.mxu0 0.0
    %510 = vmatpush1.msra.mxu0 0.0
    %511 = vmatprep.subr.mxu0 0.0
    %512 = vmatpush1.msra.mxu0 0.0
    %513 = vmatprep.subr.mxu0 0.0
    %514 = vmatpush1.msra.mxu0 0.0
    %515 = vmatprep.subr.mxu0 0.0
    %516 = vmatpush1.msra.mxu0 0.0
    %517 = vmatprep.subr.mxu0 0.0
    %518 = vmatpush1.msra.mxu0 0.0
    %519 = vmatprep.subr.mxu0 0.0
    %520 = vmatpush1.msra.mxu0 0.0
    %521 = vmatprep.mubr.f32.mxu0 0.0
    %522 = vmatmul.mubr.f32.gmra.mrb[0].mxu0 %v455
    %v523 = vpop.f32.mrb[0].mxu0
    %v524 = vadd.f32 %v254, %v523
    %v525 = vpop.f32.mrb[0].mxu0
    %526 = vdwg.mxu0
    %v527 = vadd.f32 %v331, %v524
    %v528 = vxor.u32 %v527, 2147483648
    %v529 = vmul.f32 %v528, 1.442695
    %v530 = vpow.pop %v529
    %v531 = vadd.f32 %v530, 1.0
    %v532 = vrcp.pop %v531
    %v533 = vmul.f32 1.0, %v532
    %v534 = vlaneseq
    %v535 = vshrl.u32 %v534, 7
    %v536 = vsub.s32 0, %v535
    %v537 = vrot.slane %v533, %v536
    %539 = vbcast.lane.b32.xlu0 %v537, 256
    %v540 = vpop.permute.xlu0 %539
    %s542 = sor.u32 256, 8
    %543 = vbcast.lane.b32.xlu0 %v537, %s542
    %v544 = vpop.permute.xlu0 %543
    %s546 = sor.u32 256, 16
    %547 = vbcast.lane.b32.xlu0 %v537, %s546
    %v548 = vpop.permute.xlu0 %547
    %s550 = sor.u32 256, 24
    %551 = vbcast.lane.b32.xlu0 %v537, %s550
    %v552 = vpop.permute.xlu0 %551
    %v553 = vlaneseq
    %v554 = vshrl.u32 %v553, 7
    %v555 = vsub.s32 1, %v554
    %v556 = vrot.slane %v533, %v555
    %558 = vbcast.lane.b32.xlu0 %v556, 256
    %v559 = vpop.permute.xlu0 %558
    %s561 = sor.u32 256, 8
    %562 = vbcast.lane.b32.xlu0 %v556, %s561
    %v563 = vpop.permute.xlu0 %562
    %s565 = sor.u32 256, 16
    %566 = vbcast.lane.b32.xlu0 %v556, %s565
    %v567 = vpop.permute.xlu0 %566
    %s569 = sor.u32 256, 24
    %570 = vbcast.lane.b32.xlu0 %v556, %s569
    %v571 = vpop.permute.xlu0 %570
    %v572 = vmul.f32 %v35, %v540
    %v573 = vmul.f32 %v36, %v540
    %v574 = vmul.f32 %v37, %v544
    %v575 = vmul.f32 %v38, %v544
    %v576 = vmul.f32 %v39, %v548
    %v577 = vmul.f32 %v40, %v548
    %v578 = vmul.f32 %v41, %v552
    %v579 = vmul.f32 %v42, %v552
    %v580 = vmul.f32 %v43, %v559
    %v581 = vmul.f32 %v44, %v559
    %v582 = vmul.f32 %v45, %v563
    %v583 = vmul.f32 %v46, %v563
    %v584 = vmul.f32 %v47, %v567
    %v585 = vmul.f32 %v48, %v567
    %v586 = vmul.f32 %v49, %v571
    %v587 = vmul.f32 %v50, %v571
    %588 = vst [vmem:[#allocation5] sm:$0xff] %v572
    %589 = vst [vmem:[#allocation5 + $0x8] sm:$0xff] %v573
    %590 = vst [vmem:[#allocation5 + $0x10] sm:$0xff] %v574
    %591 = vst [vmem:[#allocation5 + $0x18] sm:$0xff] %v575
    %592 = vst [vmem:[#allocation5 + $0x20] sm:$0xff] %v576
    %593 = vst [vmem:[#allocation5 + $0x28] sm:$0xff] %v577
    %594 = vst [vmem:[#allocation5 + $0x30] sm:$0xff] %v578
    %595 = vst [vmem:[#allocation5 + $0x38] sm:$0xff] %v579
    %596 = vst [vmem:[#allocation5 + $0x40] sm:$0xff] %v580
    %597 = vst [vmem:[#allocation5 + $0x48] sm:$0xff] %v581
    %598 = vst [vmem:[#allocation5 + $0x50] sm:$0xff] %v582
    %599 = vst [vmem:[#allocation5 + $0x58] sm:$0xff] %v583
    %600 = vst [vmem:[#allocation5 + $0x60] sm:$0xff] %v584
    %601 = vst [vmem:[#allocation5 + $0x68] sm:$0xff] %v585
    %602 = vst [vmem:[#allocation5 + $0x70] sm:$0xff] %v586
    %603 = vst [vmem:[#allocation5 + $0x78] sm:$0xff] %v587
    // Predicated region
    $region26: #{tpu_custom_call.1} parent=1 // pred_check
      _
    $region27: #{tpu_custom_call.1} parent=1 // pred_check_branch
      %605 = sbr.rel (0) target = $region29
    $region28: #{tpu_custom_call.1} parent=1 // pred_region
      %s607 = ssub.s32 2048, 2048
      %608 = vsyncadd [#allocation4], %s607
      %s609 = sshll.u32 [#allocation5], 4
      %s610 = int_to_ptr.vmem [resolvable:$true] %s609
      %615 = dma.vmem_to_hbm [thread:$0]  %s610, 2048, %s5, [#allocation4], 256, 256, 16
    $region29: #{tpu_custom_call.1} parent=1 // pred_fallthru
      _
    // Predicated region
    $region30: #{tpu_custom_call.1} parent=1 // pred_check
      _
    $region31: #{tpu_custom_call.1} parent=1 // pred_check_branch
      %617 = sbr.rel (0) target = $region33
    $region32: #{tpu_custom_call.1} parent=1 // pred_region
      %618 = dma.done [#allocation4], 2048
    $region33: #{tpu_custom_call.1} parent=1 // pred_fallthru
      _
    %619 = vsyncpa [#allocation3], 1
    %620 = vsyncpa [#allocation4], 1

</llo_original>
